<compile_context>
chip_gen: v7x
topology: tpu7x:2x2x1
jax: 0.10.0
libtpu: 0.0.40
codegen_flags: <defaults>
</compile_context>

<pallas_src>
import jax
import jax.numpy as jnp
from jax.experimental import pallas as pl
from jax.experimental.pallas import tpu as pltpu


def fuse_token_table(token_prefix, token_suffix, n_ctx):
    """Init-time fusion of the frozen prefix/suffix buffers into one template.

    Returns (n_cls, L, D) with:
      row 0            = token_prefix
      rows 1..1+n_ctx  = zeros (placeholder for the learnable ctx, added in-kernel)
      rows 1+n_ctx..L  = token_suffix
    Done once at module init (mirrors get_prefix_suffix_token), NOT per forward.
    """
    n_cls, _, D = token_prefix.shape
    zeros = jnp.zeros((n_cls, n_ctx, D), dtype=token_prefix.dtype)
    return jnp.concatenate([token_prefix, zeros, token_suffix], axis=1)


def _make_prompt_kernel(depth):
    """Builds the kernel body for a given DMA lookahead depth (Python int)."""

    def kernel(tgt_ref, bias_ref, ctxp_ref, mask_ref, table_hbm, out_ref, sems):
        # tgt_ref:   (B_pad,)       int32 class ids, scalar-prefetched into SMEM
        # bias_ref:  (tb, 1, D)     per-sample bias tile (VMEM)
        # ctxp_ref:  (L, D)         ctx pre-padded to full prompt length (VMEM)
        # mask_ref:  (L, 1)         1.0 on ctx rows, 0.0 elsewhere (VMEM)
        # table_hbm: (n_cls, L, D)  fused frozen template (HBM, manual DMA)
        # out_ref:   (tb, L, D)     output tile (DMA'd into directly)
        # sems:      (depth,)       DMA semaphore ring
        tb = out_ref.shape[0]
        base = pl.program_id(0) * tb

        def start_fetch(b, slot):
            t = tgt_ref[base + b]
            pltpu.make_async_copy(table_hbm.at[t], out_ref.at[b],
                                  sems.at[slot]).start()

        # Prime the DMA lookahead ring (depth is small & static -> tiny unroll).
        for b in range(depth):
            start_fetch(b, b)

        @pl.loop(0, tb)
        def _(b):
            slot = b % depth
            t = tgt_ref[base + b]
            # Wait built from the SAME source slice used at start().
            pltpu.make_async_copy(table_hbm.at[t], out_ref.at[b],
                                  sems.at[slot]).wait()

            # Refill the DMA queue before doing this element's VPU work.
            @pl.when(b + depth < tb)
            def _():
                start_fetch(b + depth, slot)

            # The DMA delivered prefix/suffix rows plus zeros on the ctx rows,
            # so a full-tile aligned RMW add assembles the prompt:
            #   out[b] = gathered + ctx_pad + mask * bias[b]
            bias_row = bias_ref[b]                               # (1, D)
            out_ref[b] = (out_ref[b] + ctxp_ref[...]
                          + mask_ref[...] * bias_row).astype(out_ref.dtype)

    return kernel


def _round_up(x, m):
    return ((x + m - 1) // m) * m


def prompt_learner_forward(bias, target, ctx, token_table, *,
                           batch_tile=32, dma_depth=8, trim_output=True):
    """Pallas implementation of PromptLearner_o.forward.

    bias:        (B, D)          float
    target:      (B,)            int   class indices
    ctx:         (n_ctx, D)      float learnable context
    token_table: (n_cls, L, D)   fused frozen template (see fuse_token_table),
                                 already cast to the working dtype at init.
    returns prompts: (B, L, D)   in bias.dtype
    """
    B, D = bias.shape
    n_cls, L, Dt = token_table.shape
    n_ctx, Dc = ctx.shape
    assert D == Dt == Dc, (D, Dt, Dc)
    assert 1 + n_ctx <= L
    out_dtype = bias.dtype
    # DMA copies raw bytes; cast the frozen table once at init, not per call.
    assert token_table.dtype == out_dtype, (token_table.dtype, out_dtype)

    # ---- batch tiling: big tiles amortize the ~0.35us/step overhead, but keep
    # >= 2 grid steps so ("parallel",) can shard across v7x's two TensorCores.
    tb = int(min(batch_tile, _round_up(B, 8)))
    tb = max(8, (tb // 8) * 8)
    if _round_up(B, tb) // tb < 2 and B > 8:
        tb = max(8, ((tb // 2) // 8) * 8)
    b_pad = _round_up(B, tb)
    depth = int(max(1, min(dma_depth, tb)))      # DMA lookahead, decoupled from tb

    target = target.astype(jnp.int32)
    bias = bias.astype(out_dtype)
    if b_pad != B:
        # Padding path only triggers when B is not a tile multiple; padded rows
        # use class 0 (valid) and are trimmed at the end.
        bias = jnp.pad(bias, ((0, b_pad - B), (0, 0)))
        target = jnp.pad(target, (0, b_pad - B))
    bias3 = bias.reshape(b_pad, 1, D)

    # Hoisted loop-invariant inputs (built once per call in XLA, never inside
    # the kernel): ctx padded to the full prompt length, and the ctx-row mask.
    ctx_pad = jnp.zeros((L, D), out_dtype).at[1:1 + n_ctx, :].set(ctx.astype(out_dtype))
    row = jnp.arange(L, dtype=jnp.int32)[:, None]
    ctx_mask = ((row >= 1) & (row < 1 + n_ctx)).astype(out_dtype)        # (L, 1)

    # VMEM budget: the double-buffered output block dominates (no gather scratch).
    esize = bias.dtype.itemsize
    out_block_bytes = 2 * tb * _round_up(L, 8) * _round_up(D, 128) * esize
    vmem_limit = int(max(out_block_bytes + (8 << 20), 32 << 20))

    grid_spec = pltpu.PrefetchScalarGridSpec(
        num_scalar_prefetch=1,                       # `target` -> SMEM
        grid=(b_pad // tb,),
        in_specs=[
            pl.BlockSpec((tb, 1, D), lambda i, tgt: (i, 0, 0)),   # bias tile
            pl.BlockSpec((L, D), lambda i, tgt: (0, 0)),          # ctx_pad (invariant)
            pl.BlockSpec((L, 1), lambda i, tgt: (0, 0)),          # ctx mask (invariant)
            pl.BlockSpec(memory_space=pl.ANY),                    # fused table in HBM
        ],
        out_specs=pl.BlockSpec((tb, L, D), lambda i, tgt: (i, 0, 0)),
        scratch_shapes=[pltpu.SemaphoreType.DMA((depth,))],
    )

    out = pl.pallas_call(
        _make_prompt_kernel(depth),
        out_shape=jax.ShapeDtypeStruct((b_pad, L, D), out_dtype),
        grid_spec=grid_spec,
        compiler_params=pltpu.CompilerParams(
            dimension_semantics=("parallel",),       # independent batch tiles
            vmem_limit_bytes=vmem_limit,
        ),
    )(target, bias3, ctx_pad, ctx_mask, token_table)

    if trim_output and b_pad != B:
        out = out[:B]
    return out


def prompt_learner_reference(bias, target, ctx, token_prefix, token_suffix):
    prefix = token_prefix[target]                       # (B, 1, D)
    suffix = token_suffix[target]                       # (B, S, D)
    ctx_shifted = ctx[None, :, :] + bias[:, None, :]    # (B, n_ctx, D)
    return jnp.concatenate([prefix, ctx_shifted, suffix], axis=1)


if __name__ == "__main__":
    # Small synthetic config (CLIP-like but shrunk): n_ctx=4 learnable context
    # tokens, total prompt length L=16, ctx_dim=128, n_cls classes.
    n_cls, n_ctx, L, D = 10, 4, 16, 128
    S = L - 1 - n_ctx

    key = jax.random.PRNGKey(0)
    k_ctx, k_pre, k_suf, k_bias, k_tgt = jax.random.split(key, 5)

    # nn.init.normal_(ctx_vectors, std=0.02); frozen CLIP token embeddings stand-ins.
    ctx = (0.02 * jax.random.normal(k_ctx, (n_ctx, D))).astype(jnp.float32)
    token_prefix = jax.random.normal(k_pre, (n_cls, 1, D), dtype=jnp.float32)
    token_suffix = jax.random.normal(k_suf, (n_cls, S, D), dtype=jnp.float32)
    token_table = fuse_token_table(token_prefix, token_suffix, n_ctx)  # init-time

    B = 16
    bias = jax.random.normal(k_bias, (B, D), dtype=jnp.float32)
    target = jax.random.randint(k_tgt, (B,), 0, n_cls, dtype=jnp.int32)
    ref = prompt_learner_reference(bias, target, ctx, token_prefix, token_suffix)

    # Case 1: B multiple of tile (2 grid steps, no padding / no trim copy).
    out = prompt_learner_forward(bias, target, ctx, token_table, batch_tile=8)
    out = jax.block_until_ready(out)
    assert out.shape == (B, L, D), out.shape
    assert jnp.allclose(out, ref, atol=1e-6, rtol=1e-6)

    # Case 2: B not a tile multiple (exercises padding + trim path).
    B2 = 10
    out2 = prompt_learner_forward(bias[:B2], target[:B2], ctx, token_table,
                                  batch_tile=8)
    out2 = jax.block_until_ready(out2)
    assert out2.shape == (B2, L, D), out2.shape
    assert jnp.allclose(out2, ref[:B2], atol=1e-6, rtol=1e-6)

    # Case 3: bf16 end-to-end (halves HBM traffic on this bandwidth-bound kernel).
    out3 = prompt_learner_forward(bias.astype(jnp.bfloat16), target,
                                  ctx.astype(jnp.bfloat16),
                                  token_table.astype(jnp.bfloat16), batch_tile=8)
    out3 = jax.block_until_ready(out3)
    assert out3.dtype == jnp.bfloat16
    assert jnp.allclose(out3.astype(jnp.float32), ref, atol=6e-2, rtol=5e-2)

    print("KERNEL_OK")
</pallas_src>

<mosaic_0001>
module attributes {stable_mosaic.version = 11 : i64} {
  func.func @kernel(%arg0: i32, %arg1: memref<16xi32, #tpu.memory_space<smem>>, %arg2: memref<8x1x128xf32, #tpu.memory_space<vmem>>, %arg3: memref<16x128xf32, #tpu.memory_space<vmem>>, %arg4: memref<16x1xf32, #tpu.memory_space<vmem>>, %arg5: memref<10x16x128xf32, #tpu.memory_space<any>>, %arg6: memref<8x16x128xf32, #tpu.memory_space<vmem>>, %arg7: memref<8x!tpu.dma_semaphore, #tpu.memory_space<semaphore_mem>>) attributes {dimension_semantics = [#tpu.dimension_semantics<parallel>], iteration_bounds = array<i64: 2>, scalar_prefetch = 1 : i64, scratch_operands = 1 : i64, tpu.core_type = #tpu.core_type<tc>, window_params = [{transform_indices = @transform_0, window_bounds = array<i64: 8, 1, 128>}, {pipeline_mode = #tpu.pipeline_mode<synchronous>, transform_indices = @transform_1, window_bounds = array<i64: 16, 128>}, {pipeline_mode = #tpu.pipeline_mode<synchronous>, transform_indices = @transform_2, window_bounds = array<i64: 16, 1>}, {}, {transform_indices = @transform_4, window_bounds = array<i64: 8, 16, 128>}]} {
    %c8_i32 = arith.constant 8 : i32
    %0 = arith.muli %arg0, %c8_i32 : i32
    %c0_i32 = arith.constant 0 : i32
    %1 = arith.addi %0, %c0_i32 : i32
    %2 = arith.index_cast %1 : i32 to index
    %3 = memref.load %arg1[%2] : memref<16xi32, #tpu.memory_space<smem>>
    %c0_i32_0 = arith.constant 0 : i32
    %c0_i32_1 = arith.constant 0 : i32
    %c0_i32_2 = arith.constant 0 : i32
    %c0_i32_3 = arith.constant 0 : i32
    %4 = tpu.memref_slice %arg5[%3, %c0_i32_2, %c0_i32_3] : memref<10x16x128xf32, #tpu.memory_space<any>> -> memref<1x16x128xf32, #tpu.memory_space<any>>
    %5 = tpu.memref_squeeze %4 : memref<1x16x128xf32, #tpu.memory_space<any>> -> memref<16x128xf32, #tpu.memory_space<any>>
    %c0_i32_4 = arith.constant 0 : i32
    %c0_i32_5 = arith.constant 0 : i32
    %6 = tpu.memref_slice %arg6[%c0_i32_0, %c0_i32_4, %c0_i32_5] : memref<8x16x128xf32, #tpu.memory_space<vmem>> -> memref<1x16x128xf32, #tpu.memory_space<vmem>>
    %7 = tpu.memref_squeeze %6 : memref<1x16x128xf32, #tpu.memory_space<vmem>> -> memref<16x128xf32, #tpu.memory_space<vmem>>
    %8 = tpu.memref_slice %arg7[%c0_i32_1] : memref<8x!tpu.dma_semaphore, #tpu.memory_space<semaphore_mem>> -> memref<1x!tpu.dma_semaphore, #tpu.memory_space<semaphore_mem>>
    %9 = tpu.memref_squeeze %8 : memref<1x!tpu.dma_semaphore, #tpu.memory_space<semaphore_mem>> -> memref<!tpu.dma_semaphore, #tpu.memory_space<semaphore_mem>>
    tpu.enqueue_dma source(%5 : memref<16x128xf32, #tpu.memory_space<any>>) target(%7 : memref<16x128xf32, #tpu.memory_space<vmem>>) target_semaphore(%9 : memref<!tpu.dma_semaphore, #tpu.memory_space<semaphore_mem>>)
    %c1_i32 = arith.constant 1 : i32
    %10 = arith.addi %0, %c1_i32 : i32
    %11 = arith.index_cast %10 : i32 to index
    %12 = memref.load %arg1[%11] : memref<16xi32, #tpu.memory_space<smem>>
    %c1_i32_6 = arith.constant 1 : i32
    %c1_i32_7 = arith.constant 1 : i32
    %c0_i32_8 = arith.constant 0 : i32
    %c0_i32_9 = arith.constant 0 : i32
    %13 = tpu.memref_slice %arg5[%12, %c0_i32_8, %c0_i32_9] : memref<10x16x128xf32, #tpu.memory_space<any>> -> memref<1x16x128xf32, #tpu.memory_space<any>>
    %14 = tpu.memref_squeeze %13 : memref<1x16x128xf32, #tpu.memory_space<any>> -> memref<16x128xf32, #tpu.memory_space<any>>
    %c0_i32_10 = arith.constant 0 : i32
    %c0_i32_11 = arith.constant 0 : i32
    %15 = tpu.memref_slice %arg6[%c1_i32_6, %c0_i32_10, %c0_i32_11] : memref<8x16x128xf32, #tpu.memory_space<vmem>> -> memref<1x16x128xf32, #tpu.memory_space<vmem>>
    %16 = tpu.memref_squeeze %15 : memref<1x16x128xf32, #tpu.memory_space<vmem>> -> memref<16x128xf32, #tpu.memory_space<vmem>>
    %17 = tpu.memref_slice %arg7[%c1_i32_7] : memref<8x!tpu.dma_semaphore, #tpu.memory_space<semaphore_mem>> -> memref<1x!tpu.dma_semaphore, #tpu.memory_space<semaphore_mem>>
    %18 = tpu.memref_squeeze %17 : memref<1x!tpu.dma_semaphore, #tpu.memory_space<semaphore_mem>> -> memref<!tpu.dma_semaphore, #tpu.memory_space<semaphore_mem>>
    tpu.enqueue_dma source(%14 : memref<16x128xf32, #tpu.memory_space<any>>) target(%16 : memref<16x128xf32, #tpu.memory_space<vmem>>) target_semaphore(%18 : memref<!tpu.dma_semaphore, #tpu.memory_space<semaphore_mem>>)
    %c2_i32 = arith.constant 2 : i32
    %19 = arith.addi %0, %c2_i32 : i32
    %20 = arith.index_cast %19 : i32 to index
    %21 = memref.load %arg1[%20] : memref<16xi32, #tpu.memory_space<smem>>
    %c2_i32_12 = arith.constant 2 : i32
    %c2_i32_13 = arith.constant 2 : i32
    %c0_i32_14 = arith.constant 0 : i32
    %c0_i32_15 = arith.constant 0 : i32
    %22 = tpu.memref_slice %arg5[%21, %c0_i32_14, %c0_i32_15] : memref<10x16x128xf32, #tpu.memory_space<any>> -> memref<1x16x128xf32, #tpu.memory_space<any>>
    %23 = tpu.memref_squeeze %22 : memref<1x16x128xf32, #tpu.memory_space<any>> -> memref<16x128xf32, #tpu.memory_space<any>>
    %c0_i32_16 = arith.constant 0 : i32
    %c0_i32_17 = arith.constant 0 : i32
    %24 = tpu.memref_slice %arg6[%c2_i32_12, %c0_i32_16, %c0_i32_17] : memref<8x16x128xf32, #tpu.memory_space<vmem>> -> memref<1x16x128xf32, #tpu.memory_space<vmem>>
    %25 = tpu.memref_squeeze %24 : memref<1x16x128xf32, #tpu.memory_space<vmem>> -> memref<16x128xf32, #tpu.memory_space<vmem>>
    %26 = tpu.memref_slice %arg7[%c2_i32_13] : memref<8x!tpu.dma_semaphore, #tpu.memory_space<semaphore_mem>> -> memref<1x!tpu.dma_semaphore, #tpu.memory_space<semaphore_mem>>
    %27 = tpu.memref_squeeze %26 : memref<1x!tpu.dma_semaphore, #tpu.memory_space<semaphore_mem>> -> memref<!tpu.dma_semaphore, #tpu.memory_space<semaphore_mem>>
    tpu.enqueue_dma source(%23 : memref<16x128xf32, #tpu.memory_space<any>>) target(%25 : memref<16x128xf32, #tpu.memory_space<vmem>>) target_semaphore(%27 : memref<!tpu.dma_semaphore, #tpu.memory_space<semaphore_mem>>)
    %c3_i32 = arith.constant 3 : i32
    %28 = arith.addi %0, %c3_i32 : i32
    %29 = arith.index_cast %28 : i32 to index
    %30 = memref.load %arg1[%29] : memref<16xi32, #tpu.memory_space<smem>>
    %c3_i32_18 = arith.constant 3 : i32
    %c3_i32_19 = arith.constant 3 : i32
    %c0_i32_20 = arith.constant 0 : i32
    %c0_i32_21 = arith.constant 0 : i32
    %31 = tpu.memref_slice %arg5[%30, %c0_i32_20, %c0_i32_21] : memref<10x16x128xf32, #tpu.memory_space<any>> -> memref<1x16x128xf32, #tpu.memory_space<any>>
    %32 = tpu.memref_squeeze %31 : memref<1x16x128xf32, #tpu.memory_space<any>> -> memref<16x128xf32, #tpu.memory_space<any>>
    %c0_i32_22 = arith.constant 0 : i32
    %c0_i32_23 = arith.constant 0 : i32
    %33 = tpu.memref_slice %arg6[%c3_i32_18, %c0_i32_22, %c0_i32_23] : memref<8x16x128xf32, #tpu.memory_space<vmem>> -> memref<1x16x128xf32, #tpu.memory_space<vmem>>
    %34 = tpu.memref_squeeze %33 : memref<1x16x128xf32, #tpu.memory_space<vmem>> -> memref<16x128xf32, #tpu.memory_space<vmem>>
    %35 = tpu.memref_slice %arg7[%c3_i32_19] : memref<8x!tpu.dma_semaphore, #tpu.memory_space<semaphore_mem>> -> memref<1x!tpu.dma_semaphore, #tpu.memory_space<semaphore_mem>>
    %36 = tpu.memref_squeeze %35 : memref<1x!tpu.dma_semaphore, #tpu.memory_space<semaphore_mem>> -> memref<!tpu.dma_semaphore, #tpu.memory_space<semaphore_mem>>
    tpu.enqueue_dma source(%32 : memref<16x128xf32, #tpu.memory_space<any>>) target(%34 : memref<16x128xf32, #tpu.memory_space<vmem>>) target_semaphore(%36 : memref<!tpu.dma_semaphore, #tpu.memory_space<semaphore_mem>>)
    %c4_i32 = arith.constant 4 : i32
    %37 = arith.addi %0, %c4_i32 : i32
    %38 = arith.index_cast %37 : i32 to index
    %39 = memref.load %arg1[%38] : memref<16xi32, #tpu.memory_space<smem>>
    %c4_i32_24 = arith.constant 4 : i32
    %c4_i32_25 = arith.constant 4 : i32
    %c0_i32_26 = arith.constant 0 : i32
    %c0_i32_27 = arith.constant 0 : i32
    %40 = tpu.memref_slice %arg5[%39, %c0_i32_26, %c0_i32_27] : memref<10x16x128xf32, #tpu.memory_space<any>> -> memref<1x16x128xf32, #tpu.memory_space<any>>
    %41 = tpu.memref_squeeze %40 : memref<1x16x128xf32, #tpu.memory_space<any>> -> memref<16x128xf32, #tpu.memory_space<any>>
    %c0_i32_28 = arith.constant 0 : i32
    %c0_i32_29 = arith.constant 0 : i32
    %42 = tpu.memref_slice %arg6[%c4_i32_24, %c0_i32_28, %c0_i32_29] : memref<8x16x128xf32, #tpu.memory_space<vmem>> -> memref<1x16x128xf32, #tpu.memory_space<vmem>>
    %43 = tpu.memref_squeeze %42 : memref<1x16x128xf32, #tpu.memory_space<vmem>> -> memref<16x128xf32, #tpu.memory_space<vmem>>
    %44 = tpu.memref_slice %arg7[%c4_i32_25] : memref<8x!tpu.dma_semaphore, #tpu.memory_space<semaphore_mem>> -> memref<1x!tpu.dma_semaphore, #tpu.memory_space<semaphore_mem>>
    %45 = tpu.memref_squeeze %44 : memref<1x!tpu.dma_semaphore, #tpu.memory_space<semaphore_mem>> -> memref<!tpu.dma_semaphore, #tpu.memory_space<semaphore_mem>>
    tpu.enqueue_dma source(%41 : memref<16x128xf32, #tpu.memory_space<any>>) target(%43 : memref<16x128xf32, #tpu.memory_space<vmem>>) target_semaphore(%45 : memref<!tpu.dma_semaphore, #tpu.memory_space<semaphore_mem>>)
    %c5_i32 = arith.constant 5 : i32
    %46 = arith.addi %0, %c5_i32 : i32
    %47 = arith.index_cast %46 : i32 to index
    %48 = memref.load %arg1[%47] : memref<16xi32, #tpu.memory_space<smem>>
    %c5_i32_30 = arith.constant 5 : i32
    %c5_i32_31 = arith.constant 5 : i32
    %c0_i32_32 = arith.constant 0 : i32
    %c0_i32_33 = arith.constant 0 : i32
    %49 = tpu.memref_slice %arg5[%48, %c0_i32_32, %c0_i32_33] : memref<10x16x128xf32, #tpu.memory_space<any>> -> memref<1x16x128xf32, #tpu.memory_space<any>>
    %50 = tpu.memref_squeeze %49 : memref<1x16x128xf32, #tpu.memory_space<any>> -> memref<16x128xf32, #tpu.memory_space<any>>
    %c0_i32_34 = arith.constant 0 : i32
    %c0_i32_35 = arith.constant 0 : i32
    %51 = tpu.memref_slice %arg6[%c5_i32_30, %c0_i32_34, %c0_i32_35] : memref<8x16x128xf32, #tpu.memory_space<vmem>> -> memref<1x16x128xf32, #tpu.memory_space<vmem>>
    %52 = tpu.memref_squeeze %51 : memref<1x16x128xf32, #tpu.memory_space<vmem>> -> memref<16x128xf32, #tpu.memory_space<vmem>>
    %53 = tpu.memref_slice %arg7[%c5_i32_31] : memref<8x!tpu.dma_semaphore, #tpu.memory_space<semaphore_mem>> -> memref<1x!tpu.dma_semaphore, #tpu.memory_space<semaphore_mem>>
    %54 = tpu.memref_squeeze %53 : memref<1x!tpu.dma_semaphore, #tpu.memory_space<semaphore_mem>> -> memref<!tpu.dma_semaphore, #tpu.memory_space<semaphore_mem>>
    tpu.enqueue_dma source(%50 : memref<16x128xf32, #tpu.memory_space<any>>) target(%52 : memref<16x128xf32, #tpu.memory_space<vmem>>) target_semaphore(%54 : memref<!tpu.dma_semaphore, #tpu.memory_space<semaphore_mem>>)
    %c6_i32 = arith.constant 6 : i32
    %55 = arith.addi %0, %c6_i32 : i32
    %56 = arith.index_cast %55 : i32 to index
    %57 = memref.load %arg1[%56] : memref<16xi32, #tpu.memory_space<smem>>
    %c6_i32_36 = arith.constant 6 : i32
    %c6_i32_37 = arith.constant 6 : i32
    %c0_i32_38 = arith.constant 0 : i32
    %c0_i32_39 = arith.constant 0 : i32
    %58 = tpu.memref_slice %arg5[%57, %c0_i32_38, %c0_i32_39] : memref<10x16x128xf32, #tpu.memory_space<any>> -> memref<1x16x128xf32, #tpu.memory_space<any>>
    %59 = tpu.memref_squeeze %58 : memref<1x16x128xf32, #tpu.memory_space<any>> -> memref<16x128xf32, #tpu.memory_space<any>>
    %c0_i32_40 = arith.constant 0 : i32
    %c0_i32_41 = arith.constant 0 : i32
    %60 = tpu.memref_slice %arg6[%c6_i32_36, %c0_i32_40, %c0_i32_41] : memref<8x16x128xf32, #tpu.memory_space<vmem>> -> memref<1x16x128xf32, #tpu.memory_space<vmem>>
    %61 = tpu.memref_squeeze %60 : memref<1x16x128xf32, #tpu.memory_space<vmem>> -> memref<16x128xf32, #tpu.memory_space<vmem>>
    %62 = tpu.memref_slice %arg7[%c6_i32_37] : memref<8x!tpu.dma_semaphore, #tpu.memory_space<semaphore_mem>> -> memref<1x!tpu.dma_semaphore, #tpu.memory_space<semaphore_mem>>
    %63 = tpu.memref_squeeze %62 : memref<1x!tpu.dma_semaphore, #tpu.memory_space<semaphore_mem>> -> memref<!tpu.dma_semaphore, #tpu.memory_space<semaphore_mem>>
    tpu.enqueue_dma source(%59 : memref<16x128xf32, #tpu.memory_space<any>>) target(%61 : memref<16x128xf32, #tpu.memory_space<vmem>>) target_semaphore(%63 : memref<!tpu.dma_semaphore, #tpu.memory_space<semaphore_mem>>)
    %c7_i32 = arith.constant 7 : i32
    %64 = arith.addi %0, %c7_i32 : i32
    %65 = arith.index_cast %64 : i32 to index
    %66 = memref.load %arg1[%65] : memref<16xi32, #tpu.memory_space<smem>>
    %c7_i32_42 = arith.constant 7 : i32
    %c7_i32_43 = arith.constant 7 : i32
    %c0_i32_44 = arith.constant 0 : i32
    %c0_i32_45 = arith.constant 0 : i32
    %67 = tpu.memref_slice %arg5[%66, %c0_i32_44, %c0_i32_45] : memref<10x16x128xf32, #tpu.memory_space<any>> -> memref<1x16x128xf32, #tpu.memory_space<any>>
    %68 = tpu.memref_squeeze %67 : memref<1x16x128xf32, #tpu.memory_space<any>> -> memref<16x128xf32, #tpu.memory_space<any>>
    %c0_i32_46 = arith.constant 0 : i32
    %c0_i32_47 = arith.constant 0 : i32
    %69 = tpu.memref_slice %arg6[%c7_i32_42, %c0_i32_46, %c0_i32_47] : memref<8x16x128xf32, #tpu.memory_space<vmem>> -> memref<1x16x128xf32, #tpu.memory_space<vmem>>
    %70 = tpu.memref_squeeze %69 : memref<1x16x128xf32, #tpu.memory_space<vmem>> -> memref<16x128xf32, #tpu.memory_space<vmem>>
    %71 = tpu.memref_slice %arg7[%c7_i32_43] : memref<8x!tpu.dma_semaphore, #tpu.memory_space<semaphore_mem>> -> memref<1x!tpu.dma_semaphore, #tpu.memory_space<semaphore_mem>>
    %72 = tpu.memref_squeeze %71 : memref<1x!tpu.dma_semaphore, #tpu.memory_space<semaphore_mem>> -> memref<!tpu.dma_semaphore, #tpu.memory_space<semaphore_mem>>
    tpu.enqueue_dma source(%68 : memref<16x128xf32, #tpu.memory_space<any>>) target(%70 : memref<16x128xf32, #tpu.memory_space<vmem>>) target_semaphore(%72 : memref<!tpu.dma_semaphore, #tpu.memory_space<semaphore_mem>>)
    %c0_i32_48 = arith.constant 0 : i32
    %c8_i32_49 = arith.constant 8 : i32
    %73 = arith.addi %c0_i32_48, %c8_i32_49 : i32
    %c1_i32_50 = arith.constant 1 : i32
    scf.for %arg8 = %c0_i32_48 to %73 step %c1_i32_50  : i32 {
      %c1_i32_52 = arith.constant 1 : i32
      %74 = arith.muli %arg8, %c1_i32_52 : i32
      %c0_i32_53 = arith.constant 0 : i32
      %75 = arith.addi %c0_i32_53, %74 : i32
      %c8_i32_54 = arith.constant 8 : i32
      %c0_i32_55 = arith.constant 0 : i32
      %76 = arith.cmpi eq, %c8_i32_54, %c0_i32_55 : i32
      %c1_i32_56 = arith.constant 1 : i32
      %77 = arith.select %76, %c1_i32_56, %c8_i32_54 : i32
      %78 = arith.remsi %75, %77 : i32
      %c0_i32_57 = arith.constant 0 : i32
      %79 = arith.cmpi ne, %78, %c0_i32_57 : i32
      %c0_i32_58 = arith.constant 0 : i32
      %80 = arith.cmpi slt, %78, %c0_i32_58 : i32
      %c0_i32_59 = arith.constant 0 : i32
      %81 = arith.cmpi slt, %77, %c0_i32_59 : i32
      %82 = arith.xori %80, %81 : i1
      %83 = arith.andi %82, %79 : i1
      %84 = arith.addi %78, %77 : i32
      %85 = arith.select %83, %84, %78 : i32
      %86 = arith.addi %0, %75 : i32
      %87 = arith.index_cast %86 : i32 to index
      %88 = memref.load %arg1[%87] : memref<16xi32, #tpu.memory_space<smem>>
      %c0_i32_60 = arith.constant 0 : i32
      %c0_i32_61 = arith.constant 0 : i32
      %89 = tpu.memref_slice %arg5[%88, %c0_i32_60, %c0_i32_61] : memref<10x16x128xf32, #tpu.memory_space<any>> -> memref<1x16x128xf32, #tpu.memory_space<any>>
      %90 = tpu.memref_squeeze %89 : memref<1x16x128xf32, #tpu.memory_space<any>> -> memref<16x128xf32, #tpu.memory_space<any>>
      %c0_i32_62 = arith.constant 0 : i32
      %c0_i32_63 = arith.constant 0 : i32
      %91 = tpu.memref_slice %arg6[%75, %c0_i32_62, %c0_i32_63] : memref<8x16x128xf32, #tpu.memory_space<vmem>> -> memref<1x16x128xf32, #tpu.memory_space<vmem>>
      %92 = tpu.memref_squeeze %91 : memref<1x16x128xf32, #tpu.memory_space<vmem>> -> memref<16x128xf32, #tpu.memory_space<vmem>>
      %93 = tpu.memref_slice %arg7[%85] : memref<8x!tpu.dma_semaphore, #tpu.memory_space<semaphore_mem>> -> memref<1x!tpu.dma_semaphore, #tpu.memory_space<semaphore_mem>>
      %94 = tpu.memref_squeeze %93 : memref<1x!tpu.dma_semaphore, #tpu.memory_space<semaphore_mem>> -> memref<!tpu.dma_semaphore, #tpu.memory_space<semaphore_mem>>
      tpu.wait_dma2 semaphore(%94 : memref<!tpu.dma_semaphore, #tpu.memory_space<semaphore_mem>>) src(%90 : memref<16x128xf32, #tpu.memory_space<any>>) dst(%92 : memref<16x128xf32, #tpu.memory_space<vmem>>)
      %c8_i32_64 = arith.constant 8 : i32
      %95 = arith.addi %75, %c8_i32_64 : i32
      %c8_i32_65 = arith.constant 8 : i32
      %96 = arith.cmpi slt, %95, %c8_i32_65 : i32
      %97 = arith.extui %96 : i1 to i32
      %c0_i32_66 = arith.constant 0 : i32
      %98 = arith.cmpi ne, %97, %c0_i32_66 : i32
      scf.if %98 {
        %c8_i32_76 = arith.constant 8 : i32
        %116 = arith.addi %75, %c8_i32_76 : i32
        %117 = arith.addi %0, %116 : i32
        %118 = arith.index_cast %117 : i32 to index
        %119 = memref.load %arg1[%118] : memref<16xi32, #tpu.memory_space<smem>>
        %c0_i32_77 = arith.constant 0 : i32
        %c0_i32_78 = arith.constant 0 : i32
        %120 = tpu.memref_slice %arg5[%119, %c0_i32_77, %c0_i32_78] : memref<10x16x128xf32, #tpu.memory_space<any>> -> memref<1x16x128xf32, #tpu.memory_space<any>>
        %121 = tpu.memref_squeeze %120 : memref<1x16x128xf32, #tpu.memory_space<any>> -> memref<16x128xf32, #tpu.memory_space<any>>
        %c0_i32_79 = arith.constant 0 : i32
        %c0_i32_80 = arith.constant 0 : i32
        %122 = tpu.memref_slice %arg6[%116, %c0_i32_79, %c0_i32_80] : memref<8x16x128xf32, #tpu.memory_space<vmem>> -> memref<1x16x128xf32, #tpu.memory_space<vmem>>
        %123 = tpu.memref_squeeze %122 : memref<1x16x128xf32, #tpu.memory_space<vmem>> -> memref<16x128xf32, #tpu.memory_space<vmem>>
        %124 = tpu.memref_slice %arg7[%85] : memref<8x!tpu.dma_semaphore, #tpu.memory_space<semaphore_mem>> -> memref<1x!tpu.dma_semaphore, #tpu.memory_space<semaphore_mem>>
        %125 = tpu.memref_squeeze %124 : memref<1x!tpu.dma_semaphore, #tpu.memory_space<semaphore_mem>> -> memref<!tpu.dma_semaphore, #tpu.memory_space<semaphore_mem>>
        tpu.enqueue_dma source(%121 : memref<16x128xf32, #tpu.memory_space<any>>) target(%123 : memref<16x128xf32, #tpu.memory_space<vmem>>) target_semaphore(%125 : memref<!tpu.dma_semaphore, #tpu.memory_space<semaphore_mem>>)
      } else {
      }
      %99 = arith.index_cast %75 : i32 to index
      %c0 = arith.constant 0 : index
      %c0_67 = arith.constant 0 : index
      %100 = vector.load %arg2[%99, %c0, %c0_67] : memref<8x1x128xf32, #tpu.memory_space<vmem>>, vector<1x1x128xf32>
      %101 = vector.shape_cast %100 : vector<1x1x128xf32> to vector<1x128xf32>
      %102 = arith.index_cast %75 : i32 to index
      %c0_68 = arith.constant 0 : index
      %c0_69 = arith.constant 0 : index
      %103 = vector.load %arg6[%102, %c0_68, %c0_69] : memref<8x16x128xf32, #tpu.memory_space<vmem>>, vector<1x16x128xf32>
      %104 = vector.shape_cast %103 : vector<1x16x128xf32> to vector<16x128xf32>
      %c0_70 = arith.constant 0 : index
      %c0_71 = arith.constant 0 : index
      %105 = vector.load %arg3[%c0_70, %c0_71] : memref<16x128xf32, #tpu.memory_space<vmem>>, vector<16x128xf32>
      %106 = arith.addf %104, %105 : vector<16x128xf32>
      %c0_72 = arith.constant 0 : index
      %c0_73 = arith.constant 0 : index
      %107 = vector.load %arg4[%c0_72, %c0_73] : memref<16x1xf32, #tpu.memory_space<vmem>>, vector<16x1xf32>
      %108 = vector.broadcast %107 : vector<16x1xf32> to vector<16x128xf32>
      %109 = vector.broadcast %101 : vector<1x128xf32> to vector<16x128xf32>
      %110 = arith.mulf %108, %109 : vector<16x128xf32>
      %111 = arith.addf %106, %110 : vector<16x128xf32>
      %112 = arith.index_cast %75 : i32 to index
      %c0_74 = arith.constant 0 : index
      %c0_75 = arith.constant 0 : index
      %113 = vector.load %arg6[%112, %c0_74, %c0_75] : memref<8x16x128xf32, #tpu.memory_space<vmem>>, vector<1x16x128xf32>
      %114 = vector.shape_cast %113 : vector<1x16x128xf32> to vector<16x128xf32>
      %115 = vector.shape_cast %111 : vector<16x128xf32> to vector<1x16x128xf32>
      tpu.vector_store %arg6[%112, %c0_74, %c0_75], %115 {strides = array<i32>} : memref<8x16x128xf32, #tpu.memory_space<vmem>>, vector<1x16x128xf32>,
    }
    %c8_i32_51 = arith.constant 8 : i32
    return
  }
  func.func @transform_0(%arg0: i32, %arg1: memref<16xi32, #tpu.memory_space<smem>>) -> (i32, i32, i32) {
    %c0_i32 = arith.constant 0 : i32
    %c0_i32_0 = arith.constant 0 : i32
    %c0_i32_1 = arith.constant 0 : i32
    return %arg0, %c0_i32, %c0_i32_0 : i32, i32, i32
  }
  func.func @transform_1(%arg0: i32, %arg1: memref<16xi32, #tpu.memory_space<smem>>) -> (i32, i32) {
    %c0_i32 = arith.constant 0 : i32
    %c0_i32_0 = arith.constant 0 : i32
    %c0_i32_1 = arith.constant 0 : i32
    return %c0_i32, %c0_i32_0 : i32, i32
  }
  func.func @transform_2(%arg0: i32, %arg1: memref<16xi32, #tpu.memory_space<smem>>) -> (i32, i32) {
    %c0_i32 = arith.constant 0 : i32
    %c0_i32_0 = arith.constant 0 : i32
    %c0_i32_1 = arith.constant 0 : i32
    return %c0_i32, %c0_i32_0 : i32, i32
  }
  func.func @transform_4(%arg0: i32, %arg1: memref<16xi32, #tpu.memory_space<smem>>) -> (i32, i32, i32) {
    %c0_i32 = arith.constant 0 : i32
    %c0_i32_0 = arith.constant 0 : i32
    %c0_i32_1 = arith.constant 0 : i32
    return %arg0, %c0_i32, %c0_i32_0 : i32, i32, i32
  }
}

</mosaic_0001>

<llo_original>
// kernel: tpu_custom_call.1
$region0: #{tpu_custom_call.1}
  #allocation0 [shape = 'u32[]', space=smem, size = 0x4, offset = 0x4, fixed_abs, tag = 'smem constant byte address 0x4 - core index']
  #allocation1 [shape = 'u32[144,128]{1,0:T(1,128)}', space=vmem, size = 0x12000, scoped, tag = 'internal scratch']
  #allocation2 [shape = 's32[8]{0}', space=sflag, size = 0x20, scoped, tag = 'scratch operand']
  #allocation3 [shape = 's32[1]{0}', space=sflag, size = 0x4, scoped, tag = 'scoped memory for tpu_custom_call.1']
  #allocation4 [shape = 'u8[512]{0}', space=smem, size = 0x200, scoped, tag = 'prefetched SMEM operand 0']
  #allocation9 [shape = 's32[]', space=sflag, size = 0x4, offset = 0, fixed_abs, tag = 'sflag constant byte address 0x0 - dummy sync flag']
  #allocation10 [shape = 's32[]', space=sflag, size = 0x4, offset = 0, fixed_abs, tag = 'sflag constant byte address 0x0 - dummy sync flag']
  #allocation11 [shape = 'u32[]', space=smem, size = 0x4, offset = 0x44, fixed_abs, tag = 'smem constant byte address 0x44 - assertion arg 0']
  #allocation12 [shape = 'u32[]', space=smem, size = 0x4, offset = 0x48, fixed_abs, tag = 'smem constant byte address 0x48 - assertion arg 1']
  #allocation13 [shape = 's32[]', space=sflag, size = 0x4, offset = 0, fixed_abs, tag = 'sflag constant byte address 0x0 - dummy sync flag']
  #allocation14 [shape = 's32[]', space=sflag, size = 0x4, offset = 0, fixed_abs, tag = 'sflag constant byte address 0x0 - dummy sync flag']
  #allocation15 [shape = 's32[]', space=sflag, size = 0x4, offset = 0, fixed_abs, tag = 'sflag constant byte address 0x0 - dummy sync flag']
  #allocation16 [shape = 's32[]', space=sflag, size = 0x4, offset = 0, fixed_abs, tag = 'sflag constant byte address 0x0 - dummy sync flag']
  #allocation17 [shape = 's32[]', space=sflag, size = 0x4, offset = 0, fixed_abs, tag = 'sflag constant byte address 0x0 - dummy sync flag']
  #allocation18 [shape = 's32[]', space=sflag, size = 0x4, offset = 0, fixed_abs, tag = 'sflag constant byte address 0x0 - dummy sync flag']
  #allocation19 [shape = 's32[]', space=sflag, size = 0x4, offset = 0, fixed_abs, tag = 'sflag constant byte address 0x0 - dummy sync flag']
  #allocation20 [shape = 's32[]', space=sflag, size = 0x4, offset = 0, fixed_abs, tag = 'sflag constant byte address 0x0 - dummy sync flag']
  #allocation21 [shape = 's32[]', space=sflag, size = 0x4, offset = 0, fixed_abs, tag = 'sflag constant byte address 0x0 - dummy sync flag']
  #allocation22 [shape = 's32[]', space=sflag, size = 0x4, offset = 0, fixed_abs, tag = 'sflag constant byte address 0x0 - dummy sync flag']
  #allocation23 [shape = 's32[]', space=sflag, size = 0x4, offset = 0, fixed_abs, tag = 'sflag constant byte address 0x0 - dummy sync flag']
  #allocation24 [shape = 's32[]', space=sflag, size = 0x4, offset = 0, fixed_abs, tag = 'sflag constant byte address 0x0 - dummy sync flag']
  #allocation25 [shape = 's32[]', space=sflag, size = 0x4, offset = 0, fixed_abs, tag = 'sflag constant byte address 0x0 - dummy sync flag']
  #allocation26 [shape = 's32[]', space=sflag, size = 0x4, offset = 0, fixed_abs, tag = 'sflag constant byte address 0x0 - dummy sync flag']
  #allocation27 [shape = 's32[]', space=sflag, size = 0x4, offset = 0, fixed_abs, tag = 'sflag constant byte address 0x0 - dummy sync flag']
  #allocation28 [shape = 's32[]', space=sflag, size = 0x4, offset = 0, fixed_abs, tag = 'sflag constant byte address 0x0 - dummy sync flag']
  %s0 = inlined_call_operand.vmem [shape: s32[16], index: 0, kind: input, shape index: {}]
  %s1 = inlined_call_operand.vmem [shape: f32[16,1,128], index: 1, kind: input, shape index: {}]
  %s2 = inlined_call_operand.hbm [shape: f32[16,128], index: 2, kind: input, shape index: {}]
  %s3 = inlined_call_operand.vmem [shape: f32[16,1], index: 3, kind: input, shape index: {}]
  %s4 = inlined_call_operand.hbm [shape: f32[10,16,128], index: 4, kind: input, shape index: {}]
  %s5 = inlined_call_operand.hbm [shape: f32[16,16,128], index: 5, kind: output, shape index: {}]
  %s6 = sld [smem:[#allocation0]]
  $region96: #{tpu_custom_call.1} parent=0
    _
  %s8 = ssub.s32 1, %s6
  %s9 = scalar_select 0, %s8, %s6
  %s10 = sshll.u32 %s0, 4
  %s11 = int_to_ptr.vmem [resolvable:$true] %s10
  %13 = dma.vmem_to_smem %s11, 16, [#allocation4], [#allocation3]
  %14 = dma.done [#allocation3], 16
  %15 = sfence
  $region1: #{tpu_custom_call.1} parent=0
    #allocation5 [shape = 'u8[8192]{0}', space=vmem, size = 0x2000, scoped, tag = 'input window, operand 2, single buffered']
    #allocation6 [shape = 's32[2]{0}', space=sflag, size = 0x8, scoped, tag = 'scoped memory for tpu_custom_call.1']
    #allocation7 [shape = 's32[2]{0}', space=sflag, size = 0x8, scoped, tag = 'scoped memory for tpu_custom_call.1']
    #allocation8 [shape = 'u8[131072]{0}', space=vmem, size = 0x20000, scoped, tag = 'output window, operand 0']
    %16 = vsyncpa [#allocation6], 0
    %17 = vsyncpa [#allocation7], 0
    %s18 = scalar_lea.sflag [#allocation7], 1
    %19 = vsyncpa %s18, 0
    loop: start=0, step=1, limit=4
    $region2: #{tpu_custom_call.1} parent=1 // loop_pre_header
      _
    $region3: #{tpu_custom_call.1} parent=1 // loop_header
      %s21 = sphi 0, %s25
      %p22 = scmp.ge.s32.totalorder %s21, 4
      %s31 = sphi 0, %s33
      %s34 = sphi 0, %s31
      %s35 = sphi 0, %s34
      %s51 = sphi 0, %s35
      %s55 = sphi 0, %s55
      %s57 = sphi 0, %s55
      %s58 = sphi 0, %s57
      %s72 = sphi 0, %s58
      %s76 = sphi 0, %s76
      %s78 = sphi 0, %s76
      %s79 = sphi 0, %s78
      %s93 = sphi 0, %s79
      %s99 = sphi 0, %s101
      %s102 = sphi 0, %s99
      %s103 = sphi 0, %s102
      %s119 = sphi 0, %s103
    $region4: #{tpu_custom_call.1} parent=1 // loop_header_branch
      %24 = sbr.rel (%p22) target = $region8
    $region5: #{tpu_custom_call.1} parent=1 // loop_body
      %s26 = ssub.s32 %s21, 1
      %s27 = ssub.s32 %s21, 2
      %s28 = sadd.s32 %s21, 1
      %s29 = ssub.s32 %s21, %s28
      %p30 = scmp.eq.s32.totalorder %s29, 0
      %s32 = sadd.s32 %s31, 1
      %s33 = scalar_select %p30, %s31, %s32
      %p36 = pneg %p30
      %p37 = scmp.eq.s32.totalorder %s21, 1
      %p38 = por %p36, %p37
      %p39 = scmp.ne.s32.totalorder %s31, %s34
      %p40 = scmp.eq.s32.totalorder %s21, 0
      %p41 = por %p39, %p40
      %p42 = scmp.ne.s32.totalorder %s31, %s34
      %p43 = scmp.eq.s32.totalorder %s26, 1
      %p44 = por %p42, %p43
      %p45 = scmp.ne.s32.totalorder %s34, %s35
      %p46 = scmp.eq.s32.totalorder %s26, 0
      %p47 = por %p45, %p46
      %p48 = scmp.ne.s32.totalorder %s34, %s35
      %p49 = scmp.eq.s32.totalorder %s27, 1
      %p50 = por %p48, %p49
      %p52 = scmp.ne.s32.totalorder %s35, %s51
      %p53 = scmp.eq.s32.totalorder %s27, 0
      %p54 = por %p52, %p53
      %s56 = sadd.s32 %s55, 1
      %p59 = scmp.eq.s32.totalorder %s21, 1
      %p60 = scmp.ne.s32.totalorder %s55, %s57
      %p61 = scmp.eq.s32.totalorder %s21, 0
      %p62 = por %p60, %p61
      %p63 = scmp.ne.s32.totalorder %s55, %s57
      %p64 = scmp.eq.s32.totalorder %s26, 1
      %p65 = por %p63, %p64
      %p66 = scmp.ne.s32.totalorder %s57, %s58
      %p67 = scmp.eq.s32.totalorder %s26, 0
      %p68 = por %p66, %p67
      %p69 = scmp.ne.s32.totalorder %s57, %s58
      %p70 = scmp.eq.s32.totalorder %s27, 1
      %p71 = por %p69, %p70
      %p73 = scmp.ne.s32.totalorder %s58, %s72
      %p74 = scmp.eq.s32.totalorder %s27, 0
      %p75 = por %p73, %p74
      %s77 = sadd.s32 %s76, 1
      %p80 = scmp.eq.s32.totalorder %s21, 1
      %p81 = scmp.ne.s32.totalorder %s76, %s78
      %p82 = scmp.eq.s32.totalorder %s21, 0
      %p83 = por %p81, %p82
      %p84 = scmp.ne.s32.totalorder %s76, %s78
      %p85 = scmp.eq.s32.totalorder %s26, 1
      %p86 = por %p84, %p85
      %p87 = scmp.ne.s32.totalorder %s78, %s79
      %p88 = scmp.eq.s32.totalorder %s26, 0
      %p89 = por %p87, %p88
      %p90 = scmp.ne.s32.totalorder %s78, %s79
      %p91 = scmp.eq.s32.totalorder %s27, 1
      %p92 = por %p90, %p91
      %p94 = scmp.ne.s32.totalorder %s79, %s93
      %p95 = scmp.eq.s32.totalorder %s27, 0
      %p96 = por %p94, %p95
      %s97 = ssub.s32 %s21, %s28
      %p98 = scmp.eq.s32.totalorder %s97, 0
      %s100 = sadd.s32 %s99, 1
      %s101 = scalar_select %p98, %s99, %s100
      %p104 = pneg %p98
      %p105 = scmp.eq.s32.totalorder %s21, 1
      %p106 = por %p104, %p105
      %p107 = scmp.ne.s32.totalorder %s99, %s102
      %p108 = scmp.eq.s32.totalorder %s21, 0
      %p109 = por %p107, %p108
      %p110 = scmp.ne.s32.totalorder %s99, %s102
      %p111 = scmp.eq.s32.totalorder %s26, 1
      %p112 = por %p110, %p111
      %p113 = scmp.ne.s32.totalorder %s102, %s103
      %p114 = scmp.eq.s32.totalorder %s26, 0
      %p115 = por %p113, %p114
      %p116 = scmp.ne.s32.totalorder %s102, %s103
      %p117 = scmp.eq.s32.totalorder %s27, 1
      %p118 = por %p116, %p117
      %p120 = scmp.ne.s32.totalorder %s103, %s119
      %p121 = scmp.eq.s32.totalorder %s27, 0
      %p122 = por %p120, %p121
      %p123 = scmp.le.s32.totalorder 1, %s21
      %p124 = scmp.lt.s32.totalorder %s21, 3
      %p125 = pnand %p123, %p124
      %p126 = pneg %p125
      // Predicated region
      $region9: #{tpu_custom_call.1} parent=5 // pred_check
        _
      $region10: #{tpu_custom_call.1} parent=5 // pred_check_branch
        %128 = sbr.rel (%p125) target = $region12
      $region11: #{tpu_custom_call.1} parent=5 // pred_region
        %s129 = ssub.s32 %s21, 1
        // Predicated region
        $region13: #{tpu_custom_call.1} parent=11 // pred_check
          %p130 = pneg %p68
        $region14: #{tpu_custom_call.1} parent=11 // pred_check_branch
          %132 = sbr.rel (%p130) target = $region16
        $region15: #{tpu_custom_call.1} parent=11 // pred_region
          %s134 = ssub.s32 256, 256
          %135 = vsyncadd [#allocation6], %s134
          %s136 = sshll.u32 [#allocation5], 4
          %s137 = int_to_ptr.vmem [resolvable:$true] %s136
          %142 = dma.hbm_to_vmem [thread:$0]  %s2, 256, %s137, [#allocation6], 128, 128, 8
        $region16: #{tpu_custom_call.1} parent=11 // pred_fallthru
          _
        // Predicated region
        $region17: #{tpu_custom_call.1} parent=11 // pred_check
          %p143 = pneg %p89
        $region18: #{tpu_custom_call.1} parent=11 // pred_check_branch
          %145 = sbr.rel (%p143) target = $region20
        $region19: #{tpu_custom_call.1} parent=11 // pred_region
          _
        $region20: #{tpu_custom_call.1} parent=11 // pred_fallthru
          _
      $region12: #{tpu_custom_call.1} parent=5 // pred_fallthru
        _
      %p146 = scmp.lt.s32.totalorder %s21, 2
      // Predicated region
      $region21: #{tpu_custom_call.1} parent=5 // pred_check
        %p147 = pneg %p146
      $region22: #{tpu_custom_call.1} parent=5 // pred_check_branch
        %149 = sbr.rel (%p147) target = $region24
      $region23: #{tpu_custom_call.1} parent=5 // pred_region
        // Predicated region
        $region25: #{tpu_custom_call.1} parent=23 // pred_check
          %p150 = pneg %p41
        $region26: #{tpu_custom_call.1} parent=23 // pred_check_branch
          %152 = sbr.rel (%p150) target = $region28
        $region27: #{tpu_custom_call.1} parent=23 // pred_region
          %s153 = smul.u32 8, %s21
          %p154 = scmp.lt.s32.totalorder %s153, 15
          %s155 = scalar_select %p154, %s153, 15
          %s156 = scalar_lea.vmem %s1, %s155
          %s157 = smul.u32 8, %s21
        $region28: #{tpu_custom_call.1} parent=23 // pred_fallthru
          _
      $region24: #{tpu_custom_call.1} parent=5 // pred_fallthru
        _
      %p158 = scmp.le.s32.totalorder 1, %s21
      %p159 = scmp.lt.s32.totalorder %s21, 3
      %p160 = pnand %p158, %p159
      %p161 = pneg %p160
      // Predicated region
      $region29: #{tpu_custom_call.1} parent=5 // pred_check
        _
      $region30: #{tpu_custom_call.1} parent=5 // pred_check_branch
        %163 = sbr.rel (%p160) target = $region32
      $region31: #{tpu_custom_call.1} parent=5 // pred_region
        %s164 = ssub.s32 %s21, 1
        // Predicated region
        $region33: #{tpu_custom_call.1} parent=31 // pred_check
          %p165 = pneg %p68
        $region34: #{tpu_custom_call.1} parent=31 // pred_check_branch
          %167 = sbr.rel (%p165) target = $region36
        $region35: #{tpu_custom_call.1} parent=31 // pred_region
          %168 = dma.done [#allocation6], 256
        $region36: #{tpu_custom_call.1} parent=31 // pred_fallthru
          _
        %s169 = smul.u32 8, %s26
        %p170 = scmp.lt.s32.totalorder %s169, 15
        %s171 = scalar_select %p170, %s169, 15
        %s172 = scalar_lea.vmem %s1, %s171
        %p173 = pneg %p47
        %p174 = pneg %p44
        %p175 = pneg %p68
        %p176 = pneg %p65
        %p177 = pneg %p89
        %p178 = pneg %p86
        %p179 = pneg %p115
        %p180 = pneg %p112
        %s181 = sand.u32 %s102, 1
        %s182 = scalar_lea.sflag [#allocation7], %s181
        %s183 = sand.u32 %s102, 1
        %s184 = smul.addr %s183, 128
        %s185 = scalar_lea.vmem [#allocation8], %s184
        %s186 = smul.u32 8, %s26
        %p187 = scmp.lt.s32.totalorder %s186, 15
        %s188 = scalar_select %p187, %s186, 15
        %s189 = scalar_lea.vmem %s1, %s188
        %s190 = smul.u32 8, %s26
        %s191 = smul.u32 8, %s26
        %s192 = smul.u32 %s26, 8
        %s193 = sld [smem:[#allocation4 + %s192]]
        %s194 = smul.u32 %s193, 16
        %s195 = smul.addr %s194, 16
        %s196 = scalar_lea.hbm %s4, %s195
        // Predicated region
        $region37: #{tpu_custom_call.1} parent=31 // pred_check
          _
        $region38: #{tpu_custom_call.1} parent=31 // pred_check_branch
          %198 = sbr.rel target = $region40
        $region39: #{tpu_custom_call.1} parent=31 // pred_region
          %199 = sst [smem:[#allocation11]] [#allocation10]
          %200 = sst [smem:[#allocation12]] [#allocation9]
        $region40: #{tpu_custom_call.1} parent=31 // pred_fallthru
          _
        %202 = shalt.err (0)
        %s204 = sshll.u32 %s185, 4
        %s205 = int_to_ptr.vmem [resolvable:$true] %s204
        %207 = dma.hbm_to_vmem [thread:$0]  %s196, 256, %s205, [#allocation2]
        %s208 = sadd.s32 %s192, 1
        %s209 = sld [smem:[#allocation4 + %s208]]
        %s210 = smul.u32 %s209, 16
        %s211 = smul.addr %s210, 16
        %s212 = scalar_lea.hbm %s4, %s211
        %s213 = scalar_lea.vmem %s185, 16 [#allocation8]
        %s214 = scalar_lea.sflag [#allocation2], 1
        // Predicated region
        $region41: #{tpu_custom_call.1} parent=31 // pred_check
          _
        $region42: #{tpu_custom_call.1} parent=31 // pred_check_branch
          %216 = sbr.rel target = $region44
        $region43: #{tpu_custom_call.1} parent=31 // pred_region
          %217 = sst [smem:[#allocation11]] [#allocation14]
          %218 = sst [smem:[#allocation12]] [#allocation13]
        $region44: #{tpu_custom_call.1} parent=31 // pred_fallthru
          _
        %220 = shalt.err (0)
        %s222 = sshll.u32 %s213, 4
        %s223 = int_to_ptr.vmem [resolvable:$true] %s222
        %225 = dma.hbm_to_vmem [thread:$0]  %s212, 256, %s223, %s214
        %s226 = sadd.s32 %s192, 2
        %s227 = sld [smem:[#allocation4 + %s226]]
        %s228 = smul.u32 %s227, 16
        %s229 = smul.addr %s228, 16
        %s230 = scalar_lea.hbm %s4, %s229
        %s231 = scalar_lea.vmem %s185, 32 [#allocation8]
        %s232 = scalar_lea.sflag [#allocation2], 2
        // Predicated region
        $region45: #{tpu_custom_call.1} parent=31 // pred_check
          _
        $region46: #{tpu_custom_call.1} parent=31 // pred_check_branch
          %234 = sbr.rel target = $region48
        $region47: #{tpu_custom_call.1} parent=31 // pred_region
          %235 = sst [smem:[#allocation11]] [#allocation16]
          %236 = sst [smem:[#allocation12]] [#allocation15]
        $region48: #{tpu_custom_call.1} parent=31 // pred_fallthru
          _
        %238 = shalt.err (0)
        %s240 = sshll.u32 %s231, 4
        %s241 = int_to_ptr.vmem [resolvable:$true] %s240
        %243 = dma.hbm_to_vmem [thread:$0]  %s230, 256, %s241, %s232
        %s244 = sadd.s32 %s192, 3
        %s245 = sld [smem:[#allocation4 + %s244]]
        %s246 = smul.u32 %s245, 16
        %s247 = smul.addr %s246, 16
        %s248 = scalar_lea.hbm %s4, %s247
        %s249 = scalar_lea.vmem %s185, 48 [#allocation8]
        %s250 = scalar_lea.sflag [#allocation2], 3
        // Predicated region
        $region49: #{tpu_custom_call.1} parent=31 // pred_check
          _
        $region50: #{tpu_custom_call.1} parent=31 // pred_check_branch
          %252 = sbr.rel target = $region52
        $region51: #{tpu_custom_call.1} parent=31 // pred_region
          %253 = sst [smem:[#allocation11]] [#allocation18]
          %254 = sst [smem:[#allocation12]] [#allocation17]
        $region52: #{tpu_custom_call.1} parent=31 // pred_fallthru
          _
        %256 = shalt.err (0)
        %s258 = sshll.u32 %s249, 4
        %s259 = int_to_ptr.vmem [resolvable:$true] %s258
        %261 = dma.hbm_to_vmem [thread:$0]  %s248, 256, %s259, %s250
        %s262 = sadd.s32 %s192, 4
        %s263 = sld [smem:[#allocation4 + %s262]]
        %s264 = smul.u32 %s263, 16
        %s265 = smul.addr %s264, 16
        %s266 = scalar_lea.hbm %s4, %s265
        %s267 = scalar_lea.vmem %s185, 64 [#allocation8]
        %s268 = scalar_lea.sflag [#allocation2], 4
        // Predicated region
        $region53: #{tpu_custom_call.1} parent=31 // pred_check
          _
        $region54: #{tpu_custom_call.1} parent=31 // pred_check_branch
          %270 = sbr.rel target = $region56
        $region55: #{tpu_custom_call.1} parent=31 // pred_region
          %271 = sst [smem:[#allocation11]] [#allocation20]
          %272 = sst [smem:[#allocation12]] [#allocation19]
        $region56: #{tpu_custom_call.1} parent=31 // pred_fallthru
          _
        %274 = shalt.err (0)
        %s276 = sshll.u32 %s267, 4
        %s277 = int_to_ptr.vmem [resolvable:$true] %s276
        %279 = dma.hbm_to_vmem [thread:$0]  %s266, 256, %s277, %s268
        %s280 = sadd.s32 %s192, 5
        %s281 = sld [smem:[#allocation4 + %s280]]
        %s282 = smul.u32 %s281, 16
        %s283 = smul.addr %s282, 16
        %s284 = scalar_lea.hbm %s4, %s283
        %s285 = scalar_lea.vmem %s185, 80 [#allocation8]
        %s286 = scalar_lea.sflag [#allocation2], 5
        // Predicated region
        $region57: #{tpu_custom_call.1} parent=31 // pred_check
          _
        $region58: #{tpu_custom_call.1} parent=31 // pred_check_branch
          %288 = sbr.rel target = $region60
        $region59: #{tpu_custom_call.1} parent=31 // pred_region
          %289 = sst [smem:[#allocation11]] [#allocation22]
          %290 = sst [smem:[#allocation12]] [#allocation21]
        $region60: #{tpu_custom_call.1} parent=31 // pred_fallthru
          _
        %292 = shalt.err (0)
        %s294 = sshll.u32 %s285, 4
        %s295 = int_to_ptr.vmem [resolvable:$true] %s294
        %297 = dma.hbm_to_vmem [thread:$0]  %s284, 256, %s295, %s286
        %s298 = sadd.s32 %s192, 6
        %s299 = sld [smem:[#allocation4 + %s298]]
        %s300 = smul.u32 %s299, 16
        %s301 = smul.addr %s300, 16
        %s302 = scalar_lea.hbm %s4, %s301
        %s303 = scalar_lea.vmem %s185, 96 [#allocation8]
        %s304 = scalar_lea.sflag [#allocation2], 6
        // Predicated region
        $region61: #{tpu_custom_call.1} parent=31 // pred_check
          _
        $region62: #{tpu_custom_call.1} parent=31 // pred_check_branch
          %306 = sbr.rel target = $region64
        $region63: #{tpu_custom_call.1} parent=31 // pred_region
          %307 = sst [smem:[#allocation11]] [#allocation24]
          %308 = sst [smem:[#allocation12]] [#allocation23]
        $region64: #{tpu_custom_call.1} parent=31 // pred_fallthru
          _
        %310 = shalt.err (0)
        %s312 = sshll.u32 %s303, 4
        %s313 = int_to_ptr.vmem [resolvable:$true] %s312
        %315 = dma.hbm_to_vmem [thread:$0]  %s302, 256, %s313, %s304
        %s316 = sadd.s32 %s192, 7
        %s317 = sld [smem:[#allocation4 + %s316]]
        %s318 = smul.u32 %s317, 16
        %s319 = smul.addr %s318, 16
        %s320 = scalar_lea.hbm %s4, %s319
        %s321 = scalar_lea.vmem %s185, 112 [#allocation8]
        %s322 = scalar_lea.sflag [#allocation2], 7
        // Predicated region
        $region65: #{tpu_custom_call.1} parent=31 // pred_check
          _
        $region66: #{tpu_custom_call.1} parent=31 // pred_check_branch
          %324 = sbr.rel target = $region68
        $region67: #{tpu_custom_call.1} parent=31 // pred_region
          %325 = sst [smem:[#allocation11]] [#allocation26]
          %326 = sst [smem:[#allocation12]] [#allocation25]
        $region68: #{tpu_custom_call.1} parent=31 // pred_fallthru
          _
        %328 = shalt.err (0)
        %s330 = sshll.u32 %s321, 4
        %s331 = int_to_ptr.vmem [resolvable:$true] %s330
        %333 = dma.hbm_to_vmem [thread:$0]  %s320, 256, %s331, %s322
        loop: start=0, step=1, limit=8
        $region69: #{tpu_custom_call.1} parent=31 // loop_pre_header
          _
        $region70: #{tpu_custom_call.1} parent=31 // loop_header
          %s335 = sphi 0, %s339
          %p336 = scmp.ge.s32.totalorder %s335, 8
        $region71: #{tpu_custom_call.1} parent=31 // loop_header_branch
          %338 = sbr.rel (%p336) target = $region75
        $region72: #{tpu_custom_call.1} parent=31 // loop_body
          %p340 = scmp.lt.s32.totalorder %s335, 0
          %s341 = ssub.s32 0, %s335
          %s342 = scalar_select %p340, %s341, %s335
          %s343 = sand.u32 %s342, 7
          %s344 = ssub.s32 0, %s343
          %s345 = scalar_select %p340, %s344, %s343
          %p346 = scmp.ne.s32.totalorder %s345, 0
          %p347 = scmp.lt.s32.totalorder %s345, 0
          %p348 = pnand %p347, %p346
          %p349 = pneg %p348
          %s350 = sadd.s32 %s345, 8
          %s351 = scalar_select %p349, %s350, %s345
          %s352 = sadd.s32 %s192, %s335
          %s353 = sld [smem:[#allocation4 + %s352]]
          %s354 = smul.u32 %s335, 16
          %s355 = scalar_lea.vmem %s185, %s354 [#allocation8]
          %s356 = scalar_lea.sflag [#allocation2], %s351
          %s357 = smul.u32 16, 1
          %s358 = sshll.u32 %s357, 4
          %359 = dma.done %s356, %s358
          %s360 = sadd.s32 %s335, 8
          %p361 = scmp.lt.s32.totalorder %s360, 8
          // Predicated region
          $region76: #{tpu_custom_call.1} parent=72 // pred_check
            %p362 = pneg %p361
          $region77: #{tpu_custom_call.1} parent=72 // pred_check_branch
            %364 = sbr.rel (%p362) target = $region79
          $region78: #{tpu_custom_call.1} parent=72 // pred_region
            %s365 = sadd.s32 %s192, %s360
            %s366 = sld [smem:[#allocation4 + %s365]]
            %s367 = smul.u32 %s366, 16
            %s368 = smul.addr %s367, 16
            %s369 = scalar_lea.hbm %s4, %s368
            %s370 = smul.u32 %s360, 16
            %s371 = scalar_lea.vmem %s185, %s370 [#allocation8]
            // Predicated region
            $region80: #{tpu_custom_call.1} parent=78 // pred_check
              _
            $region81: #{tpu_custom_call.1} parent=78 // pred_check_branch
              %373 = sbr.rel target = $region83
            $region82: #{tpu_custom_call.1} parent=78 // pred_region
              %374 = sst [smem:[#allocation11]] [#allocation28]
              %375 = sst [smem:[#allocation12]] [#allocation27]
            $region83: #{tpu_custom_call.1} parent=78 // pred_fallthru
              _
            %377 = shalt.err (0)
            %s379 = sshll.u32 %s371, 4
            %s380 = int_to_ptr.vmem [resolvable:$true] %s379
            %382 = dma.hbm_to_vmem [thread:$0]  %s369, 256, %s380, %s356
          $region79: #{tpu_custom_call.1} parent=72 // pred_fallthru
            _
          %s383 = scalar_lea.vmem %s189, %s335
          %v384 = vld [vmem:[%s383] sm:$0x1]
          %v385 = vld [vmem:[%s355] sm:$0xff]
          %v386 = vld [vmem:[%s355 + $0x8] sm:$0xff]
          %v387 = vld [vmem:[#allocation5] sm:$0xff]
          %v388 = vld [vmem:[#allocation5 + $0x8] sm:$0xff]
          %v389 = vadd.f32 %v385, %v387
          %v390 = vadd.f32 %v386, %v388
          %v391 = vld [vmem:[%s3] sm:$0xff]
          %v392 = vld [vmem:[%s3 + $0x8] sm:$0xff]
          %394 = vset.pattern.permute.xlu0 0
          %395 = vperm.xlu0 %394, %v391
          %v396 = vpop.permute.xlu0 %395
          %399 = vset.pattern.permute.xlu0 0
          %400 = vperm.xlu0 %399, %v392
          %v401 = vpop.permute.xlu0 %400
          %v404 = vlaneseq
          %v405 = vshrl.u32 %v404, 7
          %v406 = vsub.s32 0, %v405
          %v407 = vrot.slane %v384, %v406
          %v409 = vmul.f32 %v396, %v407
          %v410 = vmul.f32 %v401, %v407
          %v411 = vadd.f32 %v389, %v409
          %v412 = vadd.f32 %v390, %v410
          %413 = vst [vmem:[%s355] sm:$0xff] %v411
          %414 = vst [vmem:[%s355 + $0x8] sm:$0xff] %v412
        $region73: #{tpu_custom_call.1} parent=31 // loop_footer
          %s339 = sadd.s32 1, %s335
        $region74: #{tpu_custom_call.1} parent=31 // loop_footer_branch
          %334 = sbr.rel target = $region70
        $region75: #{tpu_custom_call.1} parent=31 // loop_exit
          _
        %s415 = sand.u32 %s102, 1
        %s416 = scalar_lea.sflag [#allocation7], %s415
        %s417 = sand.u32 %s102, 1
        %s418 = smul.addr %s417, 128
        %s419 = scalar_lea.vmem [#allocation8], %s418
        // Predicated region
        $region84: #{tpu_custom_call.1} parent=31 // pred_check
          %p420 = pneg %p112
        $region85: #{tpu_custom_call.1} parent=31 // pred_check_branch
          %422 = sbr.rel (%p420) target = $region87
        $region86: #{tpu_custom_call.1} parent=31 // pred_region
          %s423 = smul.u32 8, %s26
          %s425 = ssub.s32 2048, 2048
          %426 = vsyncadd %s416, %s425
          %s427 = smul.addr %s423, 2
          %s428 = smul.addr %s427, 128
          %s429 = scalar_lea.hbm %s5, %s428
          %s430 = sshll.u32 %s419, 4
          %s431 = int_to_ptr.vmem [resolvable:$true] %s430
          %436 = dma.vmem_to_hbm [thread:$0]  %s431, 2048, %s429, %s416, 128, 128, 8
        $region87: #{tpu_custom_call.1} parent=31 // pred_fallthru
          _
      $region32: #{tpu_custom_call.1} parent=5 // pred_fallthru
        _
      %p437 = scmp.le.s32.totalorder 2, %s21
      // Predicated region
      $region88: #{tpu_custom_call.1} parent=5 // pred_check
        %p438 = pneg %p437
      $region89: #{tpu_custom_call.1} parent=5 // pred_check_branch
        %440 = sbr.rel (%p438) target = $region91
      $region90: #{tpu_custom_call.1} parent=5 // pred_region
        %s441 = ssub.s32 %s21, 2
        // Predicated region
        $region92: #{tpu_custom_call.1} parent=90 // pred_check
          %p442 = pneg %p118
        $region93: #{tpu_custom_call.1} parent=90 // pred_check_branch
          %444 = sbr.rel (%p442) target = $region95
        $region94: #{tpu_custom_call.1} parent=90 // pred_region
          %s445 = sand.u32 %s103, 1
          %s446 = scalar_lea.sflag [#allocation7], %s445
          %s447 = sand.u32 %s103, 1
          %s448 = smul.addr %s447, 128
          %s449 = scalar_lea.vmem [#allocation8], %s448
          %450 = dma.done %s446, 2048
        $region95: #{tpu_custom_call.1} parent=90 // pred_fallthru
          _
      $region91: #{tpu_custom_call.1} parent=5 // pred_fallthru
        _
    $region6: #{tpu_custom_call.1} parent=1 // loop_footer
      %s25 = sadd.s32 1, %s21
    $region7: #{tpu_custom_call.1} parent=1 // loop_footer_branch
      %20 = sbr.rel target = $region3
    $region8: #{tpu_custom_call.1} parent=1 // loop_exit
      _
    %451 = vsyncpa [#allocation6], 1
    %s452 = scalar_lea.sflag [#allocation6], 1
    %453 = vsyncpa %s452, 1
    %454 = vsyncpa [#allocation7], 1
    %s455 = scalar_lea.sflag [#allocation7], 1
    %456 = vsyncpa %s455, 1
  %457 = vsyncmov [#allocation2]
  %s458 = vpop.sfrf %457
  %p459 = scmp.eq.s32.totalorder %s458, 0
  %p460 = pneg %p459
  %462 = shalt.err (%p460)
  %s463 = scalar_lea.sflag [#allocation2], 1
  %464 = vsyncmov %s463
  %s465 = vpop.sfrf %464
  %p466 = scmp.eq.s32.totalorder %s465, 0
  %p467 = pneg %p466
  %469 = shalt.err (%p467)
  %s470 = scalar_lea.sflag [#allocation2], 2
  %471 = vsyncmov %s470
  %s472 = vpop.sfrf %471
  %p473 = scmp.eq.s32.totalorder %s472, 0
  %p474 = pneg %p473
  %476 = shalt.err (%p474)
  %s477 = scalar_lea.sflag [#allocation2], 3
  %478 = vsyncmov %s477
  %s479 = vpop.sfrf %478
  %p480 = scmp.eq.s32.totalorder %s479, 0
  %p481 = pneg %p480
  %483 = shalt.err (%p481)
  %s484 = scalar_lea.sflag [#allocation2], 4
  %485 = vsyncmov %s484
  %s486 = vpop.sfrf %485
  %p487 = scmp.eq.s32.totalorder %s486, 0
  %p488 = pneg %p487
  %490 = shalt.err (%p488)
  %s491 = scalar_lea.sflag [#allocation2], 5
  %492 = vsyncmov %s491
  %s493 = vpop.sfrf %492
  %p494 = scmp.eq.s32.totalorder %s493, 0
  %p495 = pneg %p494
  %497 = shalt.err (%p495)
  %s498 = scalar_lea.sflag [#allocation2], 6
  %499 = vsyncmov %s498
  %s500 = vpop.sfrf %499
  %p501 = scmp.eq.s32.totalorder %s500, 0
  %p502 = pneg %p501
  %504 = shalt.err (%p502)
  %s505 = scalar_lea.sflag [#allocation2], 7
  %506 = vsyncmov %s505
  %s507 = vpop.sfrf %506
  %p508 = scmp.eq.s32.totalorder %s507, 0
  %p509 = pneg %p508
  %511 = shalt.err (%p509)

</llo_original>
